<compile_context>
chip_gen: v7x
topology: tpu7x:2x2x1
jax: 0.10.0
libtpu: 0.0.40
codegen_flags: <defaults>
</compile_context>

<pallas_src>
import functools

import numpy as np
import jax
import jax.numpy as jnp
from jax.experimental import pallas as pl
from jax.experimental.pallas import tpu as pltpu


def _round_up(a, b):
    return (a + b - 1) // b * b


def _bn_dory_kernel(x_ref, k_ref, l_ref, o_ref, *, maxv):
    # x_ref: (TR, THW) f32; k_ref / l_ref: (TR, 1) f32 (already scaled by 2**-d);
    # o_ref: (TR, THW) uint8.
    y = x_ref[...] * k_ref[...] + l_ref[...]          # per-row (= per N,C) affine, ">>d" folded in
    y = jnp.minimum(jnp.maximum(y, 0.0), maxv)        # clip8 clamp
    o_ref[...] = y.astype(jnp.uint8)                  # trunc toward zero, same as np.uint8 cast


def batchnorm_dory(x, k, l, d, bito=8, *, row_tile=256, hw_tile=1024):
    """x: (N, C, H, W) float32; k, l: (1, C, 1, 1) float32; returns (N, C, H, W) uint8."""
    N, C, H, W = x.shape
    HW = H * W
    R = N * C

    # Fold the ">> d" (divide by 2**d — an exact power-of-two scale) into k and l.
    scale = jnp.float32(2.0 ** (-int(d)))
    k_row = k.reshape(1, C).astype(jnp.float32) * scale
    l_row = l.reshape(1, C).astype(jnp.float32) * scale
    k2 = jnp.tile(k_row, (N, 1)).reshape(R, 1)        # (N*C, 1) — tiny, negligible cost
    l2 = jnp.tile(l_row, (N, 1)).reshape(R, 1)

    x2 = x.reshape(R, HW).astype(jnp.float32)

    # Row tiles in multiples of 32 (uint8 native sublane tile), spatial tiles in multiples
    # of 128 (lane width), capped so the double-buffered block working set stays ~3 MiB:
    #   (4 B in + 1 B out) * 2 buffers * tr * thw  ->  ~2.6 MiB at (256, 1024).
    tr = row_tile if R >= row_tile else _round_up(R, 32)
    thw = hw_tile if _round_up(HW, 128) >= hw_tile else _round_up(HW, 128)

    R_pad = _round_up(R, tr)
    HW_pad = _round_up(HW, thw)
    if (R_pad, HW_pad) != (R, HW):
        x2 = jnp.pad(x2, ((0, R_pad - R), (0, HW_pad - HW)))
        k2 = jnp.pad(k2, ((0, R_pad - R), (0, 0)))
        l2 = jnp.pad(l2, ((0, R_pad - R), (0, 0)))

    grid = (R_pad // tr, HW_pad // thw)
    kernel = functools.partial(_bn_dory_kernel, maxv=float(2 ** int(bito) - 1))

    out = pl.pallas_call(
        kernel,
        out_shape=jax.ShapeDtypeStruct((R_pad, HW_pad), jnp.uint8),
        grid=grid,
        in_specs=[
            pl.BlockSpec((tr, thw), lambda i, j: (i, j)),
            pl.BlockSpec((tr, 1), lambda i, j: (i, 0)),
            pl.BlockSpec((tr, 1), lambda i, j: (i, 0)),
        ],
        out_specs=pl.BlockSpec((tr, thw), lambda i, j: (i, j)),
        compiler_params=pltpu.CompilerParams(
            dimension_semantics=("parallel", "parallel"),
            vmem_limit_bytes=32 * 1024 * 1024,
        ),
    )(x2, k2, l2)

    return out[:R, :HW].reshape(N, C, H, W)


def _make_params(key, Cin=8, Kh=3, Kw=3, BitA=8, BitW=8, BitO=8, groups=1):
    """Deterministic re-implementation of BatchNorm_DORY.__init__ parameter shapes."""
    kk, kl = jax.random.split(key)
    # k = round(Uniform(0, 2**8)), shape (1, Cin, 1, 1)
    k = jnp.round(jax.random.uniform(kk, (1, Cin, 1, 1), jnp.float32, 0.0, 2.0 ** 8))
    # l = integers in [-th, th), shape (1, Cin, 1, 1)
    th = int(2 ** (BitA + BitW + np.log2(int(Cin / groups) * Kh * Kw) + 8 - 2 - 1))
    if th > 2 ** 30:
        th = 2 ** 30
    l = jax.random.randint(kl, (1, Cin, 1, 1), -th, th, jnp.int32).astype(jnp.float32)
    # d = scalar shift amount
    d = int(BitA + BitW + np.log2(int(Cin / groups) * Kh * Kw) + 3 - BitO)
    return k, l, d, BitO


if __name__ == "__main__":
    key = jax.random.PRNGKey(0)
    k_in, k_par = jax.random.split(key)

    N, Cin, H, W = 2, 8, 16, 16
    # Integer-valued activations (typical DORY conv-accumulator outputs).
    x = jax.random.randint(k_in, (N, Cin, H, W), 0, 2 ** 16, jnp.int32).astype(jnp.float32)

    k, l, d, bito = _make_params(k_par, Cin=Cin)

    out = batchnorm_dory(x, k, l, d, bito)
    out = jax.block_until_ready(out)

    # Reference (pure numpy, mirrors the PyTorch forward + clip8 exactly).
    xr = np.asarray(x, np.float32)
    kr = np.asarray(k, np.float32)
    lr = np.asarray(l, np.float32)
    ref = xr * kr + lr
    ref = ref / np.float32(2.0 ** d)
    maxv = np.float32(2 ** bito - 1)
    ref = np.where(ref >= maxv, maxv, ref)
    ref = np.where(ref <= 0.0, np.float32(0.0), ref)
    ref = ref.astype(np.uint8)

    diff = np.abs(np.asarray(out, np.int16) - ref.astype(np.int16))
    assert out.shape == (N, Cin, H, W) and out.dtype == jnp.uint8
    assert diff.max() <= 1, f"max diff {diff.max()}"  # <=1 ULP slack for f32 rounding at trunc boundary
    print("KERNEL_OK")
</pallas_src>

<mosaic_0001>
module attributes {stable_mosaic.version = 11 : i64} {
  func.func @_bn_dory_kernel(%arg0: i32, %arg1: i32, %arg2: memref<32x256xf32, #tpu.memory_space<vmem>>, %arg3: memref<32x1xf32, #tpu.memory_space<vmem>>, %arg4: memref<32x1xf32, #tpu.memory_space<vmem>>, %arg5: memref<32x256xi8, #tpu.memory_space<vmem>>) attributes {dimension_semantics = [#tpu.dimension_semantics<parallel>, #tpu.dimension_semantics<parallel>], iteration_bounds = array<i64: 1, 1>, scalar_prefetch = 0 : i64, scratch_operands = 0 : i64, tpu.core_type = #tpu.core_type<tc>, window_params = [{transform_indices = @transform_0, window_bounds = array<i64: 32, 256>}, {transform_indices = @transform_1, window_bounds = array<i64: 32, 1>}, {transform_indices = @transform_2, window_bounds = array<i64: 32, 1>}, {transform_indices = @transform_3, window_bounds = array<i64: 32, 256>}]} {
    %c0 = arith.constant 0 : index
    %c0_0 = arith.constant 0 : index
    %0 = vector.load %arg2[%c0, %c0_0] : memref<32x256xf32, #tpu.memory_space<vmem>>, vector<32x256xf32>
    %c0_1 = arith.constant 0 : index
    %c0_2 = arith.constant 0 : index
    %1 = vector.load %arg3[%c0_1, %c0_2] : memref<32x1xf32, #tpu.memory_space<vmem>>, vector<32x1xf32>
    %2 = vector.broadcast %1 : vector<32x1xf32> to vector<32x256xf32>
    %3 = arith.mulf %0, %2 : vector<32x256xf32>
    %c0_3 = arith.constant 0 : index
    %c0_4 = arith.constant 0 : index
    %4 = vector.load %arg4[%c0_3, %c0_4] : memref<32x1xf32, #tpu.memory_space<vmem>>, vector<32x1xf32>
    %5 = vector.broadcast %4 : vector<32x1xf32> to vector<32x256xf32>
    %6 = arith.addf %3, %5 : vector<32x256xf32>
    %cst = arith.constant 0.000000e+00 : f32
    %7 = vector.broadcast %cst : f32 to vector<32x256xf32>
    %8 = arith.maximumf %6, %7 : vector<32x256xf32>
    %cst_5 = arith.constant 2.550000e+02 : f32
    %9 = vector.broadcast %cst_5 : f32 to vector<32x256xf32>
    %10 = arith.minimumf %8, %9 : vector<32x256xf32>
    %11 = arith.fptoui %10 : vector<32x256xf32> to vector<32x256xi8>
    %c0_6 = arith.constant 0 : index
    %c0_7 = arith.constant 0 : index
    %12 = vector.load %arg5[%c0_6, %c0_7] : memref<32x256xi8, #tpu.memory_space<vmem>>, vector<32x256xi8>
    tpu.vector_store %arg5[%c0_6, %c0_7], %11 {strides = array<i32>} : memref<32x256xi8, #tpu.memory_space<vmem>>, vector<32x256xi8>,
    return
  }
  func.func @transform_0(%arg0: i32, %arg1: i32) -> (i32, i32) {
    %c0_i32 = arith.constant 0 : i32
    return %arg0, %arg1 : i32, i32
  }
  func.func @transform_1(%arg0: i32, %arg1: i32) -> (i32, i32) {
    %c0_i32 = arith.constant 0 : i32
    %c0_i32_0 = arith.constant 0 : i32
    return %arg0, %c0_i32 : i32, i32
  }
  func.func @transform_2(%arg0: i32, %arg1: i32) -> (i32, i32) {
    %c0_i32 = arith.constant 0 : i32
    %c0_i32_0 = arith.constant 0 : i32
    return %arg0, %c0_i32 : i32, i32
  }
  func.func @transform_3(%arg0: i32, %arg1: i32) -> (i32, i32) {
    %c0_i32 = arith.constant 0 : i32
    return %arg0, %arg1 : i32, i32
  }
}

</mosaic_0001>

<llo_original>
// kernel: tpu_custom_call.1
$region0: #{tpu_custom_call.1}
  #allocation0 [shape = 'u32[]', space=smem, size = 0x4, offset = 0x4, fixed_abs, tag = 'smem constant byte address 0x4 - core index']
  #allocation1 [shape = 'u32[144,128]{1,0:T(1,128)}', space=vmem, size = 0x12000, scoped, tag = 'internal scratch']
  %s0 = inlined_call_operand.vmem [shape: f32[32,256], index: 0, kind: input, shape index: {}]
  %s1 = inlined_call_operand.vmem [shape: f32[32,1], index: 1, kind: input, shape index: {}]
  %s2 = inlined_call_operand.vmem [shape: f32[32,1], index: 2, kind: input, shape index: {}]
  %s3 = inlined_call_operand.hbm [shape: u8[32,256], index: 3, kind: output, shape index: {}]
  %s4 = sld [smem:[#allocation0]]
  $region22: #{tpu_custom_call.1} parent=0
    _
  %s6 = ssub.s32 1, %s4
  %s7 = scalar_select 0, %s6, %s4
  $region1: #{tpu_custom_call.1} parent=0
    #allocation2 [shape = 'u8[8192]{0}', space=vmem, size = 0x2000, scoped, tag = 'output window, operand 0, single buffered']
    #allocation3 [shape = 's32[1]{0}', space=sflag, size = 0x4, scoped, tag = 'scoped memory for tpu_custom_call.1']
    %8 = vsyncpa [#allocation3], 0
    // Predicated region
    $region2: #{tpu_custom_call.1} parent=1 // pred_check
      _
    $region3: #{tpu_custom_call.1} parent=1 // pred_check_branch
      %10 = sbr.rel (0) target = $region5
    $region4: #{tpu_custom_call.1} parent=1 // pred_region
      _
    $region5: #{tpu_custom_call.1} parent=1 // pred_fallthru
      _
    // Predicated region
    $region6: #{tpu_custom_call.1} parent=1 // pred_check
      _
    $region7: #{tpu_custom_call.1} parent=1 // pred_check_branch
      %12 = sbr.rel (0) target = $region9
    $region8: #{tpu_custom_call.1} parent=1 // pred_region
      _
    $region9: #{tpu_custom_call.1} parent=1 // pred_fallthru
      _
    // Predicated region
    $region10: #{tpu_custom_call.1} parent=1 // pred_check
      _
    $region11: #{tpu_custom_call.1} parent=1 // pred_check_branch
      %14 = sbr.rel (0) target = $region13
    $region12: #{tpu_custom_call.1} parent=1 // pred_region
      _
    $region13: #{tpu_custom_call.1} parent=1 // pred_fallthru
      _
    %v15 = vld [vmem:[%s0] sm:$0xff]
    %v16 = vld [vmem:[%s0 + $0x8] sm:$0xff]
    %v17 = vld [vmem:[%s0 + $0x10] sm:$0xff]
    %v18 = vld [vmem:[%s0 + $0x18] sm:$0xff]
    %v19 = vld [vmem:[%s0 + $0x20] sm:$0xff]
    %v20 = vld [vmem:[%s0 + $0x28] sm:$0xff]
    %v21 = vld [vmem:[%s0 + $0x30] sm:$0xff]
    %v22 = vld [vmem:[%s0 + $0x38] sm:$0xff]
    %v23 = vld [vmem:[%s1] sm:$0xff]
    %v24 = vld [vmem:[%s1 + $0x8] sm:$0xff]
    %v25 = vld [vmem:[%s1 + $0x10] sm:$0xff]
    %v26 = vld [vmem:[%s1 + $0x18] sm:$0xff]
    %28 = vset.pattern.permute.xlu0 0
    %29 = vperm.xlu0 %28, %v23
    %v30 = vpop.permute.xlu0 %29
    %33 = vset.pattern.permute.xlu0 0
    %34 = vperm.xlu0 %33, %v24
    %v35 = vpop.permute.xlu0 %34
    %38 = vset.pattern.permute.xlu0 0
    %39 = vperm.xlu0 %38, %v25
    %v40 = vpop.permute.xlu0 %39
    %43 = vset.pattern.permute.xlu0 0
    %44 = vperm.xlu0 %43, %v26
    %v45 = vpop.permute.xlu0 %44
    %v47 = vmul.f32 %v15, %v30
    %v48 = vmul.f32 %v16, %v30
    %v49 = vmul.f32 %v17, %v35
    %v50 = vmul.f32 %v18, %v35
    %v51 = vmul.f32 %v19, %v40
    %v52 = vmul.f32 %v20, %v40
    %v53 = vmul.f32 %v21, %v45
    %v54 = vmul.f32 %v22, %v45
    %v55 = vld [vmem:[%s2] sm:$0xff]
    %v56 = vld [vmem:[%s2 + $0x8] sm:$0xff]
    %v57 = vld [vmem:[%s2 + $0x10] sm:$0xff]
    %v58 = vld [vmem:[%s2 + $0x18] sm:$0xff]
    %60 = vset.pattern.permute.xlu0 0
    %61 = vperm.xlu0 %60, %v55
    %v62 = vpop.permute.xlu0 %61
    %65 = vset.pattern.permute.xlu0 0
    %66 = vperm.xlu0 %65, %v56
    %v67 = vpop.permute.xlu0 %66
    %70 = vset.pattern.permute.xlu0 0
    %71 = vperm.xlu0 %70, %v57
    %v72 = vpop.permute.xlu0 %71
    %75 = vset.pattern.permute.xlu0 0
    %76 = vperm.xlu0 %75, %v58
    %v77 = vpop.permute.xlu0 %76
    %v79 = vadd.f32 %v47, %v62
    %v80 = vadd.f32 %v48, %v62
    %v81 = vadd.f32 %v49, %v67
    %v82 = vadd.f32 %v50, %v67
    %v83 = vadd.f32 %v51, %v72
    %v84 = vadd.f32 %v52, %v72
    %v85 = vadd.f32 %v53, %v77
    %v86 = vadd.f32 %v54, %v77
    %v87 = vmax.f32 %v79, 0.0
    %v88 = vmax.f32 %v80, 0.0
    %v89 = vmax.f32 %v81, 0.0
    %v90 = vmax.f32 %v82, 0.0
    %v91 = vmax.f32 %v83, 0.0
    %v92 = vmax.f32 %v84, 0.0
    %v93 = vmax.f32 %v85, 0.0
    %v94 = vmax.f32 %v86, 0.0
    %v95 = vmin.f32 %v87, 255.0
    %v96 = vmin.f32 %v88, 255.0
    %v97 = vmin.f32 %v89, 255.0
    %v98 = vmin.f32 %v90, 255.0
    %v99 = vmin.f32 %v91, 255.0
    %v100 = vmin.f32 %v92, 255.0
    %v101 = vmin.f32 %v93, 255.0
    %v102 = vmin.f32 %v94, 255.0
    %v103 = vtrunc.f32 %v95
    %v104 = vtrunc.f32 %v96
    %v105 = vtrunc.f32 %v97
    %v106 = vtrunc.f32 %v98
    %v107 = vtrunc.f32 %v99
    %v108 = vtrunc.f32 %v100
    %v109 = vtrunc.f32 %v101
    %v110 = vtrunc.f32 %v102
    %v111 = vpack.c.f32.eXmY %v103, %v105, 56
    %v115 = vpack.c.f32.eXmY %v107, %v109, 56
    %v119 = vpack.c.b8 %v115, %v111
    %v121 = vpack.c.f32.eXmY %v104, %v106, 56
    %v125 = vpack.c.f32.eXmY %v108, %v110, 56
    %v129 = vpack.c.b8 %v125, %v121
    %131 = vst [vmem:[#allocation2] sm:$0xff] %v119
    %132 = vst [vmem:[#allocation2 + $0x8] sm:$0xff] %v129
    // Predicated region
    $region14: #{tpu_custom_call.1} parent=1 // pred_check
      _
    $region15: #{tpu_custom_call.1} parent=1 // pred_check_branch
      %134 = sbr.rel (0) target = $region17
    $region16: #{tpu_custom_call.1} parent=1 // pred_region
      %s136 = ssub.s32 256, 256
      %137 = vsyncadd [#allocation3], %s136
      %s139 = sshll.u32 [#allocation2], 4
      %s140 = int_to_ptr.vmem [resolvable:$true] %s139
      %142 = dma.vmem_to_hbm [thread:$0]  %s140, 256, %s3, [#allocation3]
    $region17: #{tpu_custom_call.1} parent=1 // pred_fallthru
      _
    // Predicated region
    $region18: #{tpu_custom_call.1} parent=1 // pred_check
      _
    $region19: #{tpu_custom_call.1} parent=1 // pred_check_branch
      %144 = sbr.rel (0) target = $region21
    $region20: #{tpu_custom_call.1} parent=1 // pred_region
      %145 = dma.done [#allocation3], 256
    $region21: #{tpu_custom_call.1} parent=1 // pred_fallthru
      _
    %146 = vsyncpa [#allocation3], 1

</llo_original>
